<compile_context>
chip_gen: v6e
topology: v6e:2x2x1
jax: 0.10.0
libtpu: 0.0.40
codegen_flags: <defaults>
</compile_context>

<pallas_src>
import math
from functools import lru_cache, partial

import jax
import jax.numpy as jnp
from jax import lax
from jax.experimental import pallas as pl
from jax.experimental.pallas import tpu as pltpu


# ----------------------------- hardware config ------------------------------

@lru_cache(maxsize=None)
def _hw_config():
    """Per-generation tiling targets, VMEM cap and feature flags."""
    kind = ""
    try:
        kind = jax.devices()[0].device_kind.lower()
    except Exception:
        pass
    if "v5" in kind:
        # v5e: 4x128x128 MXU, 128 MiB VMEM, no bf16 VPU/EUP.
        return dict(tm=512, tn=1024, tk=1024, nk_align=128,
                    attn_tq=128, attn_tk=256,
                    vmem_limit=100 * 1024 * 1024, exp_bf16=False, two_cores=False)
    if "v7" in kind:
        # v7x: 2x256x256 MXU, only 64 MiB VMEM per TensorCore, 2 TCs per chip.
        return dict(tm=512, tn=1024, tk=512, nk_align=256,
                    attn_tq=128, attn_tk=256,
                    vmem_limit=48 * 1024 * 1024, exp_bf16=True, two_cores=True)
    # v6e / default: 2x256x256 MXU, 128 MiB VMEM, bf16 EUP.
    return dict(tm=512, tn=1024, tk=1024, nk_align=256,
                attn_tq=128, attn_tk=256,
                vmem_limit=100 * 1024 * 1024, exp_bf16=True, two_cores=False)


def _pick_tile(dim, target, aligns):
    """Largest tile <= target that divides `dim` and respects one of `aligns`;
    falls back to the full extent (always a legal block)."""
    if dim <= target:
        return dim
    for align in aligns:
        t = (target // align) * align
        while t >= align:
            if dim % t == 0:
                return t
            t -= align
    return dim


def _linear_tiles(M, N, K, cfg, itemsize):
    """Tile choice for y = x@w: as large as possible within a VMEM budget
    (fewer grid steps, fewer weight re-reads), never above ~75% of the cap."""
    budget = int(cfg["vmem_limit"] * 0.75)
    tm_t, tn_t, tk_t = cfg["tm"], cfg["tn"], cfg["tk"]
    tm = tn = tk = None
    for _ in range(6):
        tm = _pick_tile(M, tm_t, (256, 128, 8))
        tn = _pick_tile(N, tn_t, (cfg["nk_align"], 128))
        tk = _pick_tile(K, tk_t, (cfg["nk_align"], 128))
        use = 2 * (tm * tk + tk * tn + tm * tn) * itemsize + tm * tn * 4
        if use <= budget:
            break
        if tn_t >= max(tm_t, tk_t) and tn_t > 128:
            tn_t = max(tn_t // 2, 128)
        elif tk_t >= tm_t and tk_t > 128:
            tk_t = max(tk_t // 2, 128)
        else:
            tm_t = max(tm_t // 2, 8)
    # v7x: make sure both TensorCores get work on the parallel axes.
    if cfg["two_cores"] and (M // tm) * (N // tn) < 2:
        tm_alt = _pick_tile(M, max(tm // 2, 8), (256, 128, 8))
        if M // tm_alt >= 2:
            tm = tm_alt
    return tm, tn, tk


def _ffn_tiles(M, D, F, cfg, itemsize):
    budget = int(cfg["vmem_limit"] * 0.75)
    tm_t, tf_t = cfg["tm"], cfg["tn"]
    tm = tf = None
    for _ in range(6):
        tm = _pick_tile(M, tm_t, (256, 128, 8))
        tf = _pick_tile(F, tf_t, (cfg["nk_align"], 128))
        use = ((2 * (tm * D + 2 * D * tf) + tm * D) * itemsize
               + (tm * D + tm * tf) * 4)
        if use <= budget:
            break
        if tf_t > 128:
            tf_t = max(tf_t // 2, 128)
        else:
            tm_t = max(tm_t // 2, 8)
    if cfg["two_cores"] and (M // tm) < 2:
        tm_alt = _pick_tile(M, max(tm // 2, 8), (256, 128, 8))
        if M // tm_alt >= 2:
            tm = tm_alt
    return tm, tf


# ----------------------------- linear (matmul) -------------------------------

def _linear_kernel(x_ref, w_ref, b_ref, o_ref, acc_ref, *, relu):
    @pl.when(pl.program_id(2) == 0)
    def _init():
        acc_ref[...] = jnp.zeros_like(acc_ref)

    # Activation cast to the weight dtype happens in-kernel (hides under MXU work,
    # no separate XLA convert pass over the f32 activations).
    acc_ref[...] += jnp.dot(x_ref[...].astype(w_ref.dtype), w_ref[...],
                            preferred_element_type=jnp.float32)

    @pl.when(pl.program_id(2) == pl.num_programs(2) - 1)
    def _finalize():
        y = acc_ref[...] + b_ref[...].astype(jnp.float32)   # bias added in f32
        if relu:
            y = jnp.maximum(y, 0.0)
        o_ref[...] = y.astype(o_ref.dtype)


def linear_pallas(x, w, b, *, relu=False, out_dtype=None):
    """y = x @ w + b (optionally ReLU). x:(M,K), w:(K,N), b:(N,). f32 accumulator."""
    M, K = x.shape
    K2, N = w.shape
    assert K == K2
    if out_dtype is None:
        out_dtype = x.dtype
    cfg = _hw_config()
    tm, tn, tk = _linear_tiles(M, N, K, cfg, jnp.dtype(w.dtype).itemsize)
    grid = (M // tm, N // tn, K // tk)

    return pl.pallas_call(
        partial(_linear_kernel, relu=relu),
        out_shape=jax.ShapeDtypeStruct((M, N), out_dtype),
        grid=grid,
        in_specs=[
            pl.BlockSpec((tm, tk), lambda i, j, k: (i, k)),
            pl.BlockSpec((tk, tn), lambda i, j, k: (k, j)),
            pl.BlockSpec((1, tn), lambda i, j, k: (0, j)),
        ],
        out_specs=pl.BlockSpec((tm, tn), lambda i, j, k: (i, j)),
        scratch_shapes=[pltpu.VMEM((tm, tn), jnp.float32)],
        compiler_params=pltpu.CompilerParams(
            dimension_semantics=("parallel", "parallel", "arbitrary"),
            vmem_limit_bytes=cfg["vmem_limit"]),
    )(x, w, b.reshape(1, N).astype(jnp.float32))


# --------------------------------- fused FFN ----------------------------------

def _ffn_kernel(x_ref, w1_ref, b1_ref, w2_ref, b2_ref, o_ref, acc_ref):
    # grid = (M tiles, d_ff tiles); the ReLU'd (tm, tf) intermediate never touches HBM.
    @pl.when(pl.program_id(1) == 0)
    def _init():
        acc_ref[...] = jnp.zeros_like(acc_ref)

    h = jnp.dot(x_ref[...].astype(w1_ref.dtype), w1_ref[...],
                preferred_element_type=jnp.float32)
    h = jnp.maximum(h + b1_ref[...].astype(jnp.float32), 0.0)
    acc_ref[...] += jnp.dot(h.astype(w2_ref.dtype), w2_ref[...],
                            preferred_element_type=jnp.float32)

    @pl.when(pl.program_id(1) == pl.num_programs(1) - 1)
    def _finalize():
        o_ref[...] = (acc_ref[...] + b2_ref[...].astype(jnp.float32)).astype(o_ref.dtype)


def ffn_pallas(x, w1, b1, w2, b2, *, out_dtype):
    """relu(x @ w1 + b1) @ w2 + b2 in a single kernel (d_ff contracted on grid axis 1)."""
    M, D = x.shape
    F = w1.shape[1]
    cfg = _hw_config()
    tm, tf = _ffn_tiles(M, D, F, cfg, jnp.dtype(w1.dtype).itemsize)
    grid = (M // tm, F // tf)

    return pl.pallas_call(
        _ffn_kernel,
        out_shape=jax.ShapeDtypeStruct((M, D), out_dtype),
        grid=grid,
        in_specs=[
            pl.BlockSpec((tm, D), lambda i, j: (i, 0)),    # x tile resident across j
            pl.BlockSpec((D, tf), lambda i, j: (0, j)),
            pl.BlockSpec((1, tf), lambda i, j: (0, j)),
            pl.BlockSpec((tf, D), lambda i, j: (j, 0)),
            pl.BlockSpec((1, D), lambda i, j: (0, 0)),
        ],
        out_specs=pl.BlockSpec((tm, D), lambda i, j: (i, 0)),
        scratch_shapes=[pltpu.VMEM((tm, D), jnp.float32)],
        compiler_params=pltpu.CompilerParams(
            dimension_semantics=("parallel", "arbitrary"),
            vmem_limit_bytes=cfg["vmem_limit"]),
    )(x, w1, b1.reshape(1, F).astype(jnp.float32),
      w2, b2.reshape(1, D).astype(jnp.float32))


# ------------------------- fused multi-head attention ------------------------

def _mha_kernel(q_ref, k_ref, v_ref, msk_ref, o_ref,
                q_s, k_s, v_s, m_sc, l_sc, acc_sc,
                *, n_head, causal, exp_bf16):
    # Blocks: q (1, tq, D), k/v (1, tk, D), mask (1, {1|tq}, tk), out (1, tq, D).
    qi = pl.program_id(1)
    kv_step = pl.program_id(2)
    tq, D = q_ref.shape[1], q_ref.shape[2]
    tk = k_ref.shape[1]
    dk = D // n_head

    @pl.when(kv_step == 0)
    def _init():
        m_sc[...] = jnp.full_like(m_sc, -jnp.inf)
        l_sc[...] = jnp.zeros_like(l_sc)
        acc_sc[...] = jnp.zeros_like(acc_sc)
        q = q_ref[0]                                  # (tq, D) heads packed on lanes
        for h in range(n_head):                       # static staging -> (H, tq, dk)
            q_s[h] = q[:, h * dk:(h + 1) * dk]

    def _attend():
        k = k_ref[0]
        v = v_ref[0]
        for h in range(n_head):                       # static staging -> (H, tk, dk)
            k_s[h] = k[:, h * dk:(h + 1) * dk]
            v_s[h] = v[:, h * dk:(h + 1) * dk]

        # mask -> additive bias, computed ONCE per block (not once per head).
        mbias = jnp.where(jnp.broadcast_to(msk_ref[0], (tq, tk)) == 0,
                          jnp.float32(-1e9), jnp.float32(0.0))
        dims = (((1,), (1,)), ((), ()))               # contract dk of both; no k.T

        def head_step(h, carry):
            # One head live at a time: bounded vreg live ranges, no spills.
            qh = q_s[h]                               # (tq, dk)
            kh = k_s[h]                               # (tk, dk)
            vh = v_s[h]
            s = lax.dot_general(qh, kh, dims,
                                preferred_element_type=jnp.float32)
            s = s + mbias                             # softmax scale folded into Wq
            m_prev = m_sc[h]                          # (tq, 1)
            m_new = jnp.maximum(m_prev, jnp.max(s, axis=-1, keepdims=True))
            alpha = jnp.exp(m_prev - m_new)
            x_c = s - m_new
            if exp_bf16:                              # bf16 EUP path (v6e/v7x only)
                p = jnp.exp(x_c.astype(jnp.bfloat16))
                p_sum = jnp.sum(p.astype(jnp.float32), axis=-1, keepdims=True)
                pv = jnp.dot(p, vh, preferred_element_type=jnp.float32)
            else:                                     # f32 path (v5e / correctness)
                p = jnp.exp(x_c)
                p_sum = jnp.sum(p, axis=-1, keepdims=True)
                pv = jnp.dot(p.astype(vh.dtype), vh,
                             preferred_element_type=jnp.float32)
            l_sc[h] = alpha * l_sc[h] + p_sum
            acc_sc[h] = alpha * acc_sc[h] + pv
            m_sc[h] = m_new
            # TODO(synk): attention dropout omitted (eval-mode / identity).
            return carry

        lax.fori_loop(0, n_head, head_step, 0)

    if causal:
        # Skip fully-masked kv blocks of the causal self-attention mask.
        # TODO(synk): restricting the kv grid via scalar prefetch would also skip the
        # K/V DMA for these blocks; pl.when only skips the compute.
        pl.when(kv_step * tk <= qi * tq + (tq - 1))(_attend)
    else:
        _attend()

    @pl.when(kv_step == pl.num_programs(2) - 1)
    def _finalize():
        approx = jnp.dtype(o_ref.dtype) == jnp.dtype(jnp.bfloat16)
        # approx reciprocal biases normalization slightly; only used on the bf16 path.
        outs = [acc_sc[h] * pl.reciprocal(l_sc[h], approx=approx)
                for h in range(n_head)]
        o_ref[0] = jnp.concatenate(outs, axis=-1).astype(o_ref.dtype)   # lane-dense


def attention_pallas(q_arr, kv_arr, mask, n_head, d_model,
                     q_col, k_col, v_col, *, out_dtype, causal=False):
    """Scaled-dot-product MHA.  q_arr:(B,Lq,*) holds Q at block-column `q_col`
    (block width d_model); kv_arr:(B,Lk,*) holds K/V at `k_col`/`v_col`, consuming the
    fused QKV / KV projection outputs in place.  mask:(B, 1|Lq, Lk), nonzero = attend.
    The 1/sqrt(dk) scale is folded into the Q projection weights (prepare_params)."""
    cfg = _hw_config()
    B, Lq = q_arr.shape[0], q_arr.shape[1]
    Lk = kv_arr.shape[1]
    D = d_model
    assert D % n_head == 0
    dk = D // n_head
    Lm = mask.shape[1]

    tq = _pick_tile(Lq, cfg["attn_tq"], (128, 8))
    tk = _pick_tile(Lk, cfg["attn_tk"], (cfg["nk_align"], 128))
    n_q, n_kv = Lq // tq, Lk // tk
    mrows = tq if Lm == Lq else 1
    exp_bf16 = bool(cfg["exp_bf16"]) and (
        jnp.dtype(q_arr.dtype) == jnp.dtype(jnp.bfloat16))

    kernel = partial(_mha_kernel, n_head=n_head, causal=causal, exp_bf16=exp_bf16)
    return pl.pallas_call(
        kernel,
        out_shape=jax.ShapeDtypeStruct((B, Lq, D), out_dtype),
        grid=(B, n_q, n_kv),                          # reduction (kv) axis last
        in_specs=[
            pl.BlockSpec((1, tq, D), lambda b, qi, kv: (b, qi, q_col)),
            pl.BlockSpec((1, tk, D), lambda b, qi, kv: (b, kv, k_col)),
            pl.BlockSpec((1, tk, D), lambda b, qi, kv: (b, kv, v_col)),
            pl.BlockSpec((1, mrows, tk),
                         lambda b, qi, kv: (b, qi if Lm == Lq else 0, kv)),
        ],
        out_specs=pl.BlockSpec((1, tq, D), lambda b, qi, kv: (b, qi, 0)),
        scratch_shapes=[
            pltpu.VMEM((n_head, tq, dk), q_arr.dtype),   # staged per-head Q
            pltpu.VMEM((n_head, tk, dk), kv_arr.dtype),  # staged per-head K
            pltpu.VMEM((n_head, tk, dk), kv_arr.dtype),  # staged per-head V
            pltpu.VMEM((n_head, tq, 1), jnp.float32),    # running max
            pltpu.VMEM((n_head, tq, 1), jnp.float32),    # running denom
            pltpu.VMEM((n_head, tq, dk), jnp.float32),   # output accumulator
        ],
        compiler_params=pltpu.CompilerParams(
            dimension_semantics=("parallel", "parallel", "arbitrary"),
            vmem_limit_bytes=cfg["vmem_limit"]),
    )(q_arr, kv_arr, kv_arr, mask)


# --------------------------- module forward (glue) ---------------------------

def mha_forward(x_q, x_kv, mask, p, n_head, *, self_attn, compute_dtype,
                causal=False):
    B, Lq, D = x_q.shape
    Lk = x_kv.shape[1]
    mask_c = mask.astype(jnp.bfloat16)                # compact mask: half the DMA of f32

    if self_attn:
        # Fused QKV: one matmul, x read from HBM once, lane-dense (3D) output.
        qkv = linear_pallas(x_q.reshape(B * Lq, D), p["wqkv"], p["bqkv"],
                            out_dtype=compute_dtype).reshape(B, Lq, 3 * D)
        q_arr, kv_arr = qkv, qkv
        q_col, k_col, v_col = 0, 1, 2
    else:
        q_arr = linear_pallas(x_q.reshape(B * Lq, D), p["wq"], p["bq"],
                              out_dtype=compute_dtype).reshape(B, Lq, D)
        kv_arr = linear_pallas(x_kv.reshape(B * Lk, D), p["wkv"], p["bkv"],
                               out_dtype=compute_dtype).reshape(B, Lk, 2 * D)
        q_col, k_col, v_col = 0, 0, 1

    o = attention_pallas(q_arr, kv_arr, mask_c, n_head, D,
                         q_col, k_col, v_col, out_dtype=compute_dtype,
                         causal=causal)
    return linear_pallas(o.reshape(B * Lq, D), p["wo"], p["bo"],
                         out_dtype=compute_dtype).reshape(B, Lq, D)


def ffn_forward(x, p, *, compute_dtype):
    B, L, D = x.shape
    # Fused two-matmul FFN: no (B*L, d_ff) HBM round-trip.
    # TODO(synk): FFN dropout omitted (eval-mode / identity).
    y = ffn_pallas(x.reshape(B * L, D), p["w1"], p["b1"], p["w2"], p["b2"],
                   out_dtype=jnp.float32)
    return y.reshape(B, L, D)


def decoder_layer_forward(x, mask, memory, src_mask, fused_params, n_head,
                          compute_dtype=jnp.bfloat16, self_mask_causal=False):
    x = mha_forward(x, x, mask, fused_params["self_mha"], n_head,
                    self_attn=True, compute_dtype=compute_dtype,
                    causal=self_mask_causal)
    x = mha_forward(x, memory, src_mask, fused_params["mha"], n_head,
                    self_attn=False, compute_dtype=compute_dtype)
    return ffn_forward(x, fused_params["ffn"], compute_dtype=compute_dtype)


# ----------------------------- parameter setup -------------------------------

def _init_linear(key, fan_in, fan_out):
    kw, kb = jax.random.split(key)
    lim = 1.0 / math.sqrt(fan_in)
    w = jax.random.uniform(kw, (fan_in, fan_out), jnp.float32, -lim, lim)
    b = jax.random.uniform(kb, (fan_out,), jnp.float32, -lim, lim)
    return w, b


def init_params(key, d_model, d_ff):
    keys = jax.random.split(key, 10)

    def mha_params(ks):
        wq, bq = _init_linear(ks[0], d_model, d_model)
        wk, bk = _init_linear(ks[1], d_model, d_model)
        wv, bv = _init_linear(ks[2], d_model, d_model)
        wo, bo = _init_linear(ks[3], d_model, d_model)
        return dict(wq=wq, bq=bq, wk=wk, bk=bk, wv=wv, bv=bv, wo=wo, bo=bo)

    w1, b1 = _init_linear(keys[8], d_model, d_ff)
    w2, b2 = _init_linear(keys[9], d_ff, d_model)
    return {
        "self_mha": mha_params(keys[0:4]),
        "mha": mha_params(keys[4:8]),
        "ffn": dict(w1=w1, b1=b1, w2=w2, b2=b2),
    }


def prepare_params(params, compute_dtype, n_head):
    """Pre-fuse QKV / KV weights, fold the 1/sqrt(dk) softmax scale into the Q
    projection (weights AND bias), and cast weights to the compute dtype.
    Biases stay f32 and are added onto the f32 accumulator inside the kernels."""
    cd = compute_dtype
    sm, cm, ff = params["self_mha"], params["mha"], params["ffn"]
    d_model = sm["wq"].shape[0]
    scale = 1.0 / math.sqrt(d_model // n_head)

    self_mha = dict(
        wqkv=jnp.concatenate([sm["wq"] * scale, sm["wk"], sm["wv"]],
                             axis=1).astype(cd),
        bqkv=jnp.concatenate([sm["bq"] * scale, sm["bk"], sm["bv"]], axis=0),
        wo=sm["wo"].astype(cd), bo=sm["bo"],
    )
    cross_mha = dict(
        wq=(cm["wq"] * scale).astype(cd), bq=cm["bq"] * scale,
        wkv=jnp.concatenate([cm["wk"], cm["wv"]], axis=1).astype(cd),
        bkv=jnp.concatenate([cm["bk"], cm["bv"]], axis=0),
        wo=cm["wo"].astype(cd), bo=cm["bo"],
    )
    # TODO(synk): optional fp8 weight quantization for v7x not implemented.
    ffn = dict(w1=ff["w1"].astype(cd), b1=ff["b1"],
               w2=ff["w2"].astype(cd), b2=ff["b2"])
    return dict(self_mha=self_mha, mha=cross_mha, ffn=ffn)


# ------------------------------ pure-JAX reference ----------------------------

def _ref_mha(x_q, x_kv, mask, p, H):
    B, Lq, D = x_q.shape
    Lk = x_kv.shape[1]
    dk = D // H
    q = (x_q @ p["wq"] + p["bq"]).reshape(B, Lq, H, dk).transpose(0, 2, 1, 3)
    k = (x_kv @ p["wk"] + p["bk"]).reshape(B, Lk, H, dk).transpose(0, 2, 1, 3)
    v = (x_kv @ p["wv"] + p["bv"]).reshape(B, Lk, H, dk).transpose(0, 2, 1, 3)
    s = jnp.einsum("bhqd,bhkd->bhqk", q, k) / math.sqrt(dk)
    m = jnp.broadcast_to(mask.astype(jnp.float32)[:, None, :, :], s.shape)
    s = jnp.where(m == 0.0, -1e9, s)
    a = jax.nn.softmax(s, axis=-1)
    o = jnp.einsum("bhqk,bhkd->bhqd", a, v).transpose(0, 2, 1, 3).reshape(B, Lq, D)
    return o @ p["wo"] + p["bo"]


def _ref_decoder(x, mask, memory, src_mask, params, H):
    x = _ref_mha(x, x, mask, params["self_mha"], H)
    x = _ref_mha(x, memory, src_mask, params["mha"], H)
    p = params["ffn"]
    return jnp.maximum(x @ p["w1"] + p["b1"], 0.0) @ p["w2"] + p["b2"]


# ----------------------------------- main -------------------------------------

if __name__ == "__main__":
    B, L_tgt, L_src = 2, 8, 8
    d_model, n_head, d_ff = 128, 4, 256

    key = jax.random.PRNGKey(0)
    kx, kmem, kp = jax.random.split(key, 3)

    x = jax.random.normal(kx, (B, L_tgt, d_model), jnp.float32)
    memory = jax.random.normal(kmem, (B, L_src, d_model), jnp.float32)

    # self-attention mask: causal (subsequent) mask, (B, L_tgt, L_tgt)
    mask = jnp.broadcast_to(jnp.tril(jnp.ones((L_tgt, L_tgt), jnp.float32)),
                            (B, L_tgt, L_tgt))
    # cross-attention mask: all-ones padding mask, (B, 1, L_src)
    src_mask = jnp.ones((B, 1, L_src), jnp.float32)

    params = init_params(kp, d_model, d_ff)
    ref = _ref_decoder(x, mask, memory, src_mask, params, n_head)

    # --- f32 compute path: tight correctness check of the kernel math ---
    fp_f32 = prepare_params(params, jnp.float32, n_head)
    out_f32 = jax.block_until_ready(
        decoder_layer_forward(x, mask, memory, src_mask, fp_f32, n_head,
                              compute_dtype=jnp.float32, self_mask_causal=True))
    assert out_f32.shape == (B, L_tgt, d_model)
    assert jnp.allclose(out_f32, ref, atol=2e-3, rtol=2e-3), (
        float(jnp.max(jnp.abs(out_f32 - ref))))

    # --- bf16 compute path (production MXU config: bf16 inputs, f32 accumulation) ---
    fp_bf16 = prepare_params(params, jnp.bfloat16, n_head)
    out_bf16 = jax.block_until_ready(
        decoder_layer_forward(x, mask, memory, src_mask, fp_bf16, n_head,
                              compute_dtype=jnp.bfloat16, self_mask_causal=True))
    assert out_bf16.shape == (B, L_tgt, d_model)
    assert jnp.allclose(out_bf16.astype(jnp.float32), ref, atol=5e-2, rtol=5e-2), (
        float(jnp.max(jnp.abs(out_bf16.astype(jnp.float32) - ref))))

    print("KERNEL_OK")
</pallas_src>

<mosaic_0001>
module attributes {stable_mosaic.version = 11 : i64} {
  func.func @_linear_kernel(%arg0: i32, %arg1: i32, %arg2: i32, %arg3: memref<16x128xf32, #tpu.memory_space<vmem>>, %arg4: memref<128x384xf32, #tpu.memory_space<vmem>>, %arg5: memref<1x384xf32, #tpu.memory_space<vmem>>, %arg6: memref<16x384xf32, #tpu.memory_space<vmem>>, %arg7: memref<16x384xf32, #tpu.memory_space<vmem>>) attributes {dimension_semantics = [#tpu.dimension_semantics<parallel>, #tpu.dimension_semantics<parallel>, #tpu.dimension_semantics<arbitrary>], iteration_bounds = array<i64: 1, 1, 1>, scalar_prefetch = 0 : i64, scratch_operands = 1 : i64, tpu.core_type = #tpu.core_type<tc>, window_params = [{transform_indices = @transform_0, window_bounds = array<i64: 16, 128>}, {transform_indices = @transform_1, window_bounds = array<i64: 128, 384>}, {transform_indices = @transform_2, window_bounds = array<i64: 1, 384>}, {transform_indices = @transform_3, window_bounds = array<i64: 16, 384>}]} {
    %c0_i32 = arith.constant 0 : i32
    %0 = arith.cmpi eq, %arg2, %c0_i32 : i32
    %1 = arith.extui %0 : i1 to i32
    %c0_i32_0 = arith.constant 0 : i32
    %2 = arith.cmpi ne, %1, %c0_i32_0 : i32
    scf.if %2 {
      %cst_10 = arith.constant 0.000000e+00 : f32
      %12 = vector.broadcast %cst_10 : f32 to vector<16x384xf32>
      %c0_11 = arith.constant 0 : index
      %c0_12 = arith.constant 0 : index
      %13 = vector.load %arg7[%c0_11, %c0_12] : memref<16x384xf32, #tpu.memory_space<vmem>>, vector<16x384xf32>
      tpu.vector_store %arg7[%c0_11, %c0_12], %12 {strides = array<i32>} : memref<16x384xf32, #tpu.memory_space<vmem>>, vector<16x384xf32>,
    } else {
    }
    %c0 = arith.constant 0 : index
    %c0_1 = arith.constant 0 : index
    %3 = vector.load %arg7[%c0, %c0_1] : memref<16x384xf32, #tpu.memory_space<vmem>>, vector<16x384xf32>
    %c0_2 = arith.constant 0 : index
    %c0_3 = arith.constant 0 : index
    %4 = vector.load %arg3[%c0_2, %c0_3] : memref<16x128xf32, #tpu.memory_space<vmem>>, vector<16x128xf32>
    %c0_4 = arith.constant 0 : index
    %c0_5 = arith.constant 0 : index
    %5 = vector.load %arg4[%c0_4, %c0_5] : memref<128x384xf32, #tpu.memory_space<vmem>>, vector<128x384xf32>
    %cst = arith.constant dense<0.000000e+00> : vector<16x384xf32>
    %6 = tpu.matmul %4, %5, %cst {dimension_numbers = #tpu.dot_dimension_numbers<[1], [0], [0], [1], [0, 0, 1, 1], [], []>} : vector<16x128xf32>, vector<128x384xf32>, vector<16x384xf32> -> vector<16x384xf32>
    %7 = arith.addf %3, %6 : vector<16x384xf32>
    %c0_6 = arith.constant 0 : index
    %c0_7 = arith.constant 0 : index
    %8 = vector.load %arg7[%c0_6, %c0_7] : memref<16x384xf32, #tpu.memory_space<vmem>>, vector<16x384xf32>
    tpu.vector_store %arg7[%c0_6, %c0_7], %7 {strides = array<i32>} : memref<16x384xf32, #tpu.memory_space<vmem>>, vector<16x384xf32>,
    %c0_i32_8 = arith.constant 0 : i32
    %9 = arith.cmpi eq, %arg2, %c0_i32_8 : i32
    %10 = arith.extui %9 : i1 to i32
    %c0_i32_9 = arith.constant 0 : i32
    %11 = arith.cmpi ne, %10, %c0_i32_9 : i32
    scf.if %11 {
      %c0_10 = arith.constant 0 : index
      %c0_11 = arith.constant 0 : index
      %12 = vector.load %arg7[%c0_10, %c0_11] : memref<16x384xf32, #tpu.memory_space<vmem>>, vector<16x384xf32>
      %c0_12 = arith.constant 0 : index
      %c0_13 = arith.constant 0 : index
      %13 = vector.load %arg5[%c0_12, %c0_13] : memref<1x384xf32, #tpu.memory_space<vmem>>, vector<1x384xf32>
      %14 = vector.broadcast %13 : vector<1x384xf32> to vector<16x384xf32>
      %15 = arith.addf %12, %14 : vector<16x384xf32>
      %c0_14 = arith.constant 0 : index
      %c0_15 = arith.constant 0 : index
      %16 = vector.load %arg6[%c0_14, %c0_15] : memref<16x384xf32, #tpu.memory_space<vmem>>, vector<16x384xf32>
      tpu.vector_store %arg6[%c0_14, %c0_15], %15 {strides = array<i32>} : memref<16x384xf32, #tpu.memory_space<vmem>>, vector<16x384xf32>,
    } else {
    }
    return
  }
  func.func @transform_0(%arg0: i32, %arg1: i32, %arg2: i32) -> (i32, i32) {
    %c0_i32 = arith.constant 0 : i32
    return %arg0, %arg2 : i32, i32
  }
  func.func @transform_1(%arg0: i32, %arg1: i32, %arg2: i32) -> (i32, i32) {
    %c0_i32 = arith.constant 0 : i32
    return %arg2, %arg1 : i32, i32
  }
  func.func @transform_2(%arg0: i32, %arg1: i32, %arg2: i32) -> (i32, i32) {
    %c0_i32 = arith.constant 0 : i32
    %c0_i32_0 = arith.constant 0 : i32
    return %c0_i32, %arg1 : i32, i32
  }
  func.func @transform_3(%arg0: i32, %arg1: i32, %arg2: i32) -> (i32, i32) {
    %c0_i32 = arith.constant 0 : i32
    return %arg0, %arg1 : i32, i32
  }
}

</mosaic_0001>

<llo_original>
// kernel: tpu_custom_call.1
$region0: #{tpu_custom_call.1}
  #allocation0 [shape = 'u32[]', space=smem, size = 0x4, offset = 0x4, fixed_abs, tag = 'smem constant byte address 0x4 - core index']
  #allocation1 [shape = 'u32[144,128]{1,0:T(1,128)}', space=vmem, size = 0x12000, scoped, tag = 'internal scratch']
  #allocation2 [shape = 'f32[16,384]{1,0:T(8,128)}', space=vmem, size = 0x6000, scoped, tag = 'scratch operand']
  %s0 = inlined_call_operand.hbm [shape: f32[16,128], index: 0, kind: input, shape index: {}]
  %s1 = inlined_call_operand.hbm [shape: f32[128,384], index: 1, kind: input, shape index: {}]
  %s2 = inlined_call_operand.vmem [shape: f32[1,384], index: 2, kind: input, shape index: {}]
  %s3 = inlined_call_operand.hbm [shape: f32[16,384], index: 3, kind: output, shape index: {}]
  %s4 = sld [smem:[#allocation0]]
  $region38: #{tpu_custom_call.1} parent=0
    _
  %s6 = ssub.s32 1, %s4
  %s7 = scalar_select 0, %s6, %s4
  $region1: #{tpu_custom_call.1} parent=0
    #allocation3 [shape = 'u8[8192]{0}', space=vmem, size = 0x2000, scoped, tag = 'input window, operand 0, single buffered']
    #allocation4 [shape = 's32[1]{0}', space=sflag, size = 0x4, scoped, tag = 'scoped memory for tpu_custom_call.1']
    #allocation5 [shape = 's32[1]{0}', space=sflag, size = 0x4, scoped, tag = 'scoped memory for tpu_custom_call.1']
    #allocation6 [shape = 'u8[196608]{0}', space=vmem, size = 0x30000, scoped, tag = 'input window, operand 1, single buffered']
    #allocation7 [shape = 's32[1]{0}', space=sflag, size = 0x4, scoped, tag = 'scoped memory for tpu_custom_call.1']
    #allocation8 [shape = 'u8[24576]{0}', space=vmem, size = 0x6000, scoped, tag = 'output window, operand 0, single buffered']
    %8 = vsyncpa [#allocation4], 0
    %9 = vsyncpa [#allocation7], 0
    %10 = vsyncpa [#allocation5], 0
    // Predicated region
    $region2: #{tpu_custom_call.1} parent=1 // pred_check
      _
    $region3: #{tpu_custom_call.1} parent=1 // pred_check_branch
      %12 = sbr.rel (0) target = $region5
    $region4: #{tpu_custom_call.1} parent=1 // pred_region
      %s14 = ssub.s32 256, 256
      %15 = vsyncadd [#allocation4], %s14
      %s16 = sshll.u32 [#allocation3], 4
      %s17 = int_to_ptr.vmem [resolvable:$true] %s16
      %22 = dma.hbm_to_vmem [thread:$0]  %s0, 256, %s17, [#allocation4], 128, 128, 8
    $region5: #{tpu_custom_call.1} parent=1 // pred_fallthru
      _
    // Predicated region
    $region6: #{tpu_custom_call.1} parent=1 // pred_check
      _
    $region7: #{tpu_custom_call.1} parent=1 // pred_check_branch
      %24 = sbr.rel (0) target = $region9
    $region8: #{tpu_custom_call.1} parent=1 // pred_region
      %s26 = ssub.s32 6144, 6144
      %27 = vsyncadd [#allocation7], %s26
      %s28 = sshll.u32 [#allocation6], 4
      %s29 = int_to_ptr.vmem [resolvable:$true] %s28
      %34 = dma.hbm_to_vmem [thread:$0]  %s1, 6144, %s29, [#allocation7], 384, 384, 24
    $region9: #{tpu_custom_call.1} parent=1 // pred_fallthru
      _
    // Predicated region
    $region10: #{tpu_custom_call.1} parent=1 // pred_check
      _
    $region11: #{tpu_custom_call.1} parent=1 // pred_check_branch
      %36 = sbr.rel (0) target = $region13
    $region12: #{tpu_custom_call.1} parent=1 // pred_region
      _
    $region13: #{tpu_custom_call.1} parent=1 // pred_fallthru
      _
    // Predicated region
    $region14: #{tpu_custom_call.1} parent=1 // pred_check
      _
    $region15: #{tpu_custom_call.1} parent=1 // pred_check_branch
      %38 = sbr.rel (0) target = $region17
    $region16: #{tpu_custom_call.1} parent=1 // pred_region
      %39 = dma.done [#allocation4], 256
    $region17: #{tpu_custom_call.1} parent=1 // pred_fallthru
      _
    // Predicated region
    $region18: #{tpu_custom_call.1} parent=1 // pred_check
      _
    $region19: #{tpu_custom_call.1} parent=1 // pred_check_branch
      %41 = sbr.rel (0) target = $region21
    $region20: #{tpu_custom_call.1} parent=1 // pred_region
      %42 = dma.done [#allocation7], 6144
    $region21: #{tpu_custom_call.1} parent=1 // pred_fallthru
      _
    %p43 = scmp.eq.s32.totalorder 0, 0
    // Predicated region
    $region22: #{tpu_custom_call.1} parent=1 // pred_check
      %p44 = pneg %p43
    $region23: #{tpu_custom_call.1} parent=1 // pred_check_branch
      %46 = sbr.rel (%p44) target = $region25
    $region24: #{tpu_custom_call.1} parent=1 // pred_region
      %47 = vst [vmem:[#allocation2] sm:$0xff] 0.0
      %48 = vst [vmem:[#allocation2 + $0x8] sm:$0xff] 0.0
      %49 = vst [vmem:[#allocation2 + $0x10] sm:$0xff] 0.0
      %50 = vst [vmem:[#allocation2 + $0x18] sm:$0xff] 0.0
      %51 = vst [vmem:[#allocation2 + $0x20] sm:$0xff] 0.0
      %52 = vst [vmem:[#allocation2 + $0x28] sm:$0xff] 0.0
    $region25: #{tpu_custom_call.1} parent=1 // pred_fallthru
      _
    %v53 = vld [vmem:[#allocation2] sm:$0xff]
    %v54 = vld [vmem:[#allocation2 + $0x8] sm:$0xff]
    %v55 = vld [vmem:[#allocation2 + $0x10] sm:$0xff]
    %v56 = vld [vmem:[#allocation2 + $0x18] sm:$0xff]
    %v57 = vld [vmem:[#allocation2 + $0x20] sm:$0xff]
    %v58 = vld [vmem:[#allocation2 + $0x28] sm:$0xff]
    %v59 = vld [vmem:[#allocation3] sm:$0xff]
    %v60 = vld [vmem:[#allocation3 + $0x8] sm:$0xff]
    %v61 = vld [vmem:[#allocation6] sm:$0xff]
    %v62 = vld [vmem:[#allocation6 + $0x8] sm:$0xff]
    %v63 = vld [vmem:[#allocation6 + $0x10] sm:$0xff]
    %v64 = vld [vmem:[#allocation6 + $0x18] sm:$0xff]
    %v65 = vld [vmem:[#allocation6 + $0x20] sm:$0xff]
    %v66 = vld [vmem:[#allocation6 + $0x28] sm:$0xff]
    %v67 = vld [vmem:[#allocation6 + $0x30] sm:$0xff]
    %v68 = vld [vmem:[#allocation6 + $0x38] sm:$0xff]
    %v69 = vld [vmem:[#allocation6 + $0x40] sm:$0xff]
    %v70 = vld [vmem:[#allocation6 + $0x48] sm:$0xff]
    %v71 = vld [vmem:[#allocation6 + $0x50] sm:$0xff]
    %v72 = vld [vmem:[#allocation6 + $0x58] sm:$0xff]
    %v73 = vld [vmem:[#allocation6 + $0x60] sm:$0xff]
    %v74 = vld [vmem:[#allocation6 + $0x68] sm:$0xff]
    %v75 = vld [vmem:[#allocation6 + $0x70] sm:$0xff]
    %v76 = vld [vmem:[#allocation6 + $0x78] sm:$0xff]
    %v77 = vld [vmem:[#allocation6 + $0x80] sm:$0xff]
    %v78 = vld [vmem:[#allocation6 + $0x88] sm:$0xff]
    %v79 = vld [vmem:[#allocation6 + $0x90] sm:$0xff]
    %v80 = vld [vmem:[#allocation6 + $0x98] sm:$0xff]
    %v81 = vld [vmem:[#allocation6 + $0xa0] sm:$0xff]
    %v82 = vld [vmem:[#allocation6 + $0xa8] sm:$0xff]
    %v83 = vld [vmem:[#allocation6 + $0xb0] sm:$0xff]
    %v84 = vld [vmem:[#allocation6 + $0xb8] sm:$0xff]
    %v85 = vld [vmem:[#allocation6 + $0xc0] sm:$0xff]
    %v86 = vld [vmem:[#allocation6 + $0xc8] sm:$0xff]
    %v87 = vld [vmem:[#allocation6 + $0xd0] sm:$0xff]
    %v88 = vld [vmem:[#allocation6 + $0xd8] sm:$0xff]
    %v89 = vld [vmem:[#allocation6 + $0xe0] sm:$0xff]
    %v90 = vld [vmem:[#allocation6 + $0xe8] sm:$0xff]
    %v91 = vld [vmem:[#allocation6 + $0xf0] sm:$0xff]
    %v92 = vld [vmem:[#allocation6 + $0xf8] sm:$0xff]
    %v93 = vld [vmem:[#allocation6 + $0x100] sm:$0xff]
    %v94 = vld [vmem:[#allocation6 + $0x108] sm:$0xff]
    %v95 = vld [vmem:[#allocation6 + $0x110] sm:$0xff]
    %v96 = vld [vmem:[#allocation6 + $0x118] sm:$0xff]
    %v97 = vld [vmem:[#allocation6 + $0x120] sm:$0xff]
    %v98 = vld [vmem:[#allocation6 + $0x128] sm:$0xff]
    %v99 = vld [vmem:[#allocation6 + $0x130] sm:$0xff]
    %v100 = vld [vmem:[#allocation6 + $0x138] sm:$0xff]
    %v101 = vld [vmem:[#allocation6 + $0x140] sm:$0xff]
    %v102 = vld [vmem:[#allocation6 + $0x148] sm:$0xff]
    %v103 = vld [vmem:[#allocation6 + $0x150] sm:$0xff]
    %v104 = vld [vmem:[#allocation6 + $0x158] sm:$0xff]
    %v105 = vld [vmem:[#allocation6 + $0x160] sm:$0xff]
    %v106 = vld [vmem:[#allocation6 + $0x168] sm:$0xff]
    %v107 = vld [vmem:[#allocation6 + $0x170] sm:$0xff]
    %v108 = vld [vmem:[#allocation6 + $0x178] sm:$0xff]
    %109 = vmatprep.subr.mxu0 %v107
    %110 = vmatpush1.msra.mxu0 %v106
    %111 = vmatprep.subr.mxu0 %v104
    %112 = vmatpush1.msra.mxu0 %v103
    %113 = vmatprep.subr.mxu0 %v101
    %114 = vmatpush1.msra.mxu0 %v100
    %115 = vmatprep.subr.mxu0 %v98
    %116 = vmatpush1.msra.mxu0 %v97
    %117 = vmatprep.subr.mxu0 %v95
    %118 = vmatpush1.msra.mxu0 %v94
    %119 = vmatprep.subr.mxu0 %v92
    %120 = vmatpush1.msra.mxu0 %v91
    %121 = vmatprep.subr.mxu0 %v89
    %122 = vmatpush1.msra.mxu0 %v88
    %123 = vmatprep.subr.mxu0 %v86
    %124 = vmatpush1.msra.mxu0 %v85
    %125 = vmatprep.subr.mxu0 %v83
    %126 = vmatpush1.msra.mxu0 %v82
    %127 = vmatprep.subr.mxu0 %v80
    %128 = vmatpush1.msra.mxu0 %v79
    %129 = vmatprep.subr.mxu0 %v77
    %130 = vmatpush1.msra.mxu0 %v76
    %131 = vmatprep.subr.mxu0 %v74
    %132 = vmatpush1.msra.mxu0 %v73
    %133 = vmatprep.subr.mxu0 %v71
    %134 = vmatpush1.msra.mxu0 %v70
    %135 = vmatprep.subr.mxu0 %v68
    %136 = vmatpush1.msra.mxu0 %v67
    %137 = vmatprep.subr.mxu0 %v65
    %138 = vmatpush1.msra.mxu0 %v64
    %139 = vmatprep.subr.mxu0 %v62
    %140 = vmatpush1.msra.mxu0 %v61
    %141 = vmatprep.subr.mxu0 0.0
    %142 = vmatpush2.msra.mxu0 0.0
    %143 = vmatprep.subr.mxu0 0.0
    %144 = vmatpush2.msra.mxu0 0.0
    %145 = vmatprep.subr.mxu0 0.0
    %146 = vmatpush2.msra.mxu0 0.0
    %147 = vmatprep.subr.mxu0 0.0
    %148 = vmatpush2.msra.mxu0 0.0
    %149 = vmatprep.subr.mxu0 0.0
    %150 = vmatpush2.msra.mxu0 0.0
    %151 = vmatprep.subr.mxu0 0.0
    %152 = vmatpush2.msra.mxu0 0.0
    %153 = vmatprep.subr.mxu0 0.0
    %154 = vmatpush2.msra.mxu0 0.0
    %155 = vmatprep.subr.mxu0 0.0
    %156 = vmatpush2.msra.mxu0 0.0
    %157 = vmatprep.subr.mxu0 0.0
    %158 = vmatpush2.msra.mxu0 0.0
    %159 = vmatprep.subr.mxu0 0.0
    %160 = vmatpush2.msra.mxu0 0.0
    %161 = vmatprep.subr.mxu0 0.0
    %162 = vmatpush2.msra.mxu0 0.0
    %163 = vmatprep.subr.mxu0 0.0
    %164 = vmatpush2.msra.mxu0 0.0
    %165 = vmatprep.subr.mxu0 0.0
    %166 = vmatpush2.msra.mxu0 0.0
    %167 = vmatprep.subr.mxu0 0.0
    %168 = vmatpush2.msra.mxu0 0.0
    %169 = vmatprep.subr.mxu0 0.0
    %170 = vmatpush2.msra.mxu0 0.0
    %171 = vmatprep.subr.mxu0 0.0
    %172 = vmatpush2.msra.mxu0 0.0
    %173 = vmatprep.mubr.f32.mxu0 0.0
    %174 = vmatmul.mubr.f32.gmra.mxu0 %v59
    %v175 = vpop.f32.mrf.mxu0
    %v176 = vadd.f32 0.0, %v175
    %v177 = vpop.f32.mrf.mxu0
    %v178 = vadd.f32 0.0, %v177
    %179 = vmatprep.mubr.f32.mxu0 0.0
    %180 = vmatmul.mubr.f32.gmra.mxu0 %v60
    %v181 = vpop.f32.mrf.mxu0
    %v182 = vadd.f32 0.0, %v181
    %v183 = vpop.f32.mrf.mxu0
    %v184 = vadd.f32 0.0, %v183
    %185 = vdwg.mxu0
    %186 = vmatprep.subr.mxu0 0.0
    %187 = vmatpush1.msra.mxu0 %v108
    %188 = vmatprep.subr.mxu0 0.0
    %189 = vmatpush1.msra.mxu0 %v105
    %190 = vmatprep.subr.mxu0 0.0
    %191 = vmatpush1.msra.mxu0 %v102
    %192 = vmatprep.subr.mxu0 0.0
    %193 = vmatpush1.msra.mxu0 %v99
    %194 = vmatprep.subr.mxu0 0.0
    %195 = vmatpush1.msra.mxu0 %v96
    %196 = vmatprep.subr.mxu0 0.0
    %197 = vmatpush1.msra.mxu0 %v93
    %198 = vmatprep.subr.mxu0 0.0
    %199 = vmatpush1.msra.mxu0 %v90
    %200 = vmatprep.subr.mxu0 0.0
    %201 = vmatpush1.msra.mxu0 %v87
    %202 = vmatprep.subr.mxu0 0.0
    %203 = vmatpush1.msra.mxu0 %v84
    %204 = vmatprep.subr.mxu0 0.0
    %205 = vmatpush1.msra.mxu0 %v81
    %206 = vmatprep.subr.mxu0 0.0
    %207 = vmatpush1.msra.mxu0 %v78
    %208 = vmatprep.subr.mxu0 0.0
    %209 = vmatpush1.msra.mxu0 %v75
    %210 = vmatprep.subr.mxu0 0.0
    %211 = vmatpush1.msra.mxu0 %v72
    %212 = vmatprep.subr.mxu0 0.0
    %213 = vmatpush1.msra.mxu0 %v69
    %214 = vmatprep.subr.mxu0 0.0
    %215 = vmatpush1.msra.mxu0 %v66
    %216 = vmatprep.subr.mxu0 0.0
    %217 = vmatpush1.msra.mxu0 %v63
    %218 = vmatprep.subr.mxu0 0.0
    %219 = vmatpush2.msra.mxu0 0.0
    %220 = vmatprep.subr.mxu0 0.0
    %221 = vmatpush2.msra.mxu0 0.0
    %222 = vmatprep.subr.mxu0 0.0
    %223 = vmatpush2.msra.mxu0 0.0
    %224 = vmatprep.subr.mxu0 0.0
    %225 = vmatpush2.msra.mxu0 0.0
    %226 = vmatprep.subr.mxu0 0.0
    %227 = vmatpush2.msra.mxu0 0.0
    %228 = vmatprep.subr.mxu0 0.0
    %229 = vmatpush2.msra.mxu0 0.0
    %230 = vmatprep.subr.mxu0 0.0
    %231 = vmatpush2.msra.mxu0 0.0
    %232 = vmatprep.subr.mxu0 0.0
    %233 = vmatpush2.msra.mxu0 0.0
    %234 = vmatprep.subr.mxu0 0.0
    %235 = vmatpush2.msra.mxu0 0.0
    %236 = vmatprep.subr.mxu0 0.0
    %237 = vmatpush2.msra.mxu0 0.0
    %238 = vmatprep.subr.mxu0 0.0
    %239 = vmatpush2.msra.mxu0 0.0
    %240 = vmatprep.subr.mxu0 0.0
    %241 = vmatpush2.msra.mxu0 0.0
    %242 = vmatprep.subr.mxu0 0.0
    %243 = vmatpush2.msra.mxu0 0.0
    %244 = vmatprep.subr.mxu0 0.0
    %245 = vmatpush2.msra.mxu0 0.0
    %246 = vmatprep.subr.mxu0 0.0
    %247 = vmatpush2.msra.mxu0 0.0
    %248 = vmatprep.subr.mxu0 0.0
    %249 = vmatpush2.msra.mxu0 0.0
    %250 = vmatprep.mubr.f32.mxu0 0.0
    %251 = vmatmul.mubr.f32.gmra.mxu0 %v59
    %v252 = vpop.f32.mrf.mxu0
    %v253 = vadd.f32 0.0, %v252
    %v254 = vpop.f32.mrf.mxu0
    %255 = vmatprep.mubr.f32.mxu0 0.0
    %256 = vmatmul.mubr.f32.gmra.mxu0 %v60
    %v257 = vpop.f32.mrf.mxu0
    %v258 = vadd.f32 0.0, %v257
    %v259 = vpop.f32.mrf.mxu0
    %260 = vdwg.mxu0
    %v261 = vadd.f32 %v53, %v176
    %v262 = vadd.f32 %v54, %v178
    %v263 = vadd.f32 %v55, %v253
    %v264 = vadd.f32 %v56, %v182
    %v265 = vadd.f32 %v57, %v184
    %v266 = vadd.f32 %v58, %v258
    %267 = vst [vmem:[#allocation2] sm:$0xff] %v261
    %268 = vst [vmem:[#allocation2 + $0x8] sm:$0xff] %v262
    %269 = vst [vmem:[#allocation2 + $0x10] sm:$0xff] %v263
    %270 = vst [vmem:[#allocation2 + $0x18] sm:$0xff] %v264
    %271 = vst [vmem:[#allocation2 + $0x20] sm:$0xff] %v265
    %272 = vst [vmem:[#allocation2 + $0x28] sm:$0xff] %v266
    // Predicated region
    $region26: #{tpu_custom_call.1} parent=1 // pred_check
      %p273 = pneg %p43
    $region27: #{tpu_custom_call.1} parent=1 // pred_check_branch
      %275 = sbr.rel (%p273) target = $region29
    $region28: #{tpu_custom_call.1} parent=1 // pred_region
      %v276 = vld [vmem:[#allocation2] sm:$0xff]
      %v277 = vld [vmem:[#allocation2 + $0x8] sm:$0xff]
      %v278 = vld [vmem:[#allocation2 + $0x10] sm:$0xff]
      %v279 = vld [vmem:[#allocation2 + $0x18] sm:$0xff]
      %v280 = vld [vmem:[#allocation2 + $0x20] sm:$0xff]
      %v281 = vld [vmem:[#allocation2 + $0x28] sm:$0xff]
      %v282 = vld [vmem:[%s2] sm:$0x7]
      %v284 = vlaneseq
      %v285 = vshrl.u32 %v284, 7
      %v286 = vsub.s32 0, %v285
      %v287 = vrot.slane %v282, %v286
      %v288 = vlaneseq
      %v289 = vshrl.u32 %v288, 7
      %v290 = vsub.s32 1, %v289
      %v291 = vrot.slane %v282, %v290
      %v292 = vlaneseq
      %v293 = vshrl.u32 %v292, 7
      %v294 = vsub.s32 2, %v293
      %v295 = vrot.slane %v282, %v294
      %v299 = vadd.f32 %v276, %v287
      %v300 = vadd.f32 %v277, %v291
      %v301 = vadd.f32 %v278, %v295
      %v302 = vadd.f32 %v279, %v287
      %v303 = vadd.f32 %v280, %v291
      %v304 = vadd.f32 %v281, %v295
      %305 = vst [vmem:[#allocation8] sm:$0xff] %v299
      %306 = vst [vmem:[#allocation8 + $0x8] sm:$0xff] %v300
      %307 = vst [vmem:[#allocation8 + $0x10] sm:$0xff] %v301
      %308 = vst [vmem:[#allocation8 + $0x18] sm:$0xff] %v302
      %309 = vst [vmem:[#allocation8 + $0x20] sm:$0xff] %v303
      %310 = vst [vmem:[#allocation8 + $0x28] sm:$0xff] %v304
    $region29: #{tpu_custom_call.1} parent=1 // pred_fallthru
      _
    // Predicated region
    $region30: #{tpu_custom_call.1} parent=1 // pred_check
      _
    $region31: #{tpu_custom_call.1} parent=1 // pred_check_branch
      %312 = sbr.rel (0) target = $region33
    $region32: #{tpu_custom_call.1} parent=1 // pred_region
      %s314 = ssub.s32 768, 768
      %315 = vsyncadd [#allocation5], %s314
      %s316 = sshll.u32 [#allocation8], 4
      %s317 = int_to_ptr.vmem [resolvable:$true] %s316
      %322 = dma.vmem_to_hbm [thread:$0]  %s317, 768, %s3, [#allocation5], 384, 384, 24
    $region33: #{tpu_custom_call.1} parent=1 // pred_fallthru
      _
    // Predicated region
    $region34: #{tpu_custom_call.1} parent=1 // pred_check
      _
    $region35: #{tpu_custom_call.1} parent=1 // pred_check_branch
      %324 = sbr.rel (0) target = $region37
    $region36: #{tpu_custom_call.1} parent=1 // pred_region
      %325 = dma.done [#allocation5], 768
    $region37: #{tpu_custom_call.1} parent=1 // pred_fallthru
      _
    %326 = vsyncpa [#allocation4], 1
    %327 = vsyncpa [#allocation7], 1
    %328 = vsyncpa [#allocation5], 1

</llo_original>
